<compile_context>
chip_gen: v6e
topology: v6e:2x2x1
jax: 0.10.0
libtpu: 0.0.40
codegen_flags: <defaults>
</compile_context>

<pallas_src>
import functools

import jax
import jax.numpy as jnp
from jax.experimental import pallas as pl
from jax.experimental.pallas import tpu as pltpu

LANE = 128           # lane width (last dim)
NODE_PAD = 16        # pad node count to a multiple of 16 (bf16 sublane pack)
PARAM_ROWS = 8       # bias / gamma / beta / relu-gate packed, padded to 8 rows


def _round_up(x: int, m: int) -> int:
    return (x + m - 1) // m * m


# ----------------------------- Pallas kernel --------------------------------
def _fused_gnn_kernel(x_ref, a_ref, w_ref, p_ref, out_ref, *, d_real: int,
                      eps: float = 1e-5):
    """One grid step == one GCN layer; x/A/out stay resident across layers."""
    layer = pl.program_id(0)

    # Seed the resident output buffer with the input features on layer 0.
    @pl.when(layer == 0)
    def _():
        out_ref[...] = x_ref[...]

    x = out_ref[...]                       # (Np, Dp) f32, resident in VMEM
    w = w_ref[0]                           # (Dp, Dp) block-diagonal weights
    prm = p_ref[0]                         # (PARAM_ROWS, Dp)
    b = prm[0:1, :]
    gamma = prm[1:2, :]
    beta = prm[2:3, :]
    relu_gate = prm[3:4, :]                # 1.0 -> apply ReLU, 0.0 -> last layer

    # Fused content/position linears: x @ [Wc^T 0; 0 Wp^T] + [bc, bp].
    # Padded W columns / bias lanes are zero, so padded channels stay zero.
    h = jnp.dot(x, w, preferred_element_type=jnp.float32) + b

    # Symmetric-normalized 'add' aggregation with self loops: y = A @ h.
    # A arrives in bf16 (halves the O(N^2) bytes); accumulate in f32 on MXU.
    y = jnp.dot(a_ref[...], h.astype(a_ref.dtype),
                preferred_element_type=jnp.float32)

    # One-pass LayerNorm over the d_real valid channels (padded lanes are
    # exactly zero, so full-lane sums equal real-channel sums).
    inv_d = 1.0 / float(d_real)
    mean = jnp.sum(y, axis=-1, keepdims=True) * inv_d
    meansq = jnp.sum(y * y, axis=-1, keepdims=True) * inv_d
    var = jnp.maximum(meansq - mean * mean, 0.0)
    ln = (y - mean) * jax.lax.rsqrt(var + eps) * gamma + beta

    # Branchless ReLU gate: relu(z) = z - min(z, 0); last layer has gate == 0.
    ln = ln - relu_gate * jnp.minimum(ln, 0.0)

    out_ref[...] = x + ln                  # residual; written to HBM once at end


def fused_gnn(x_pad, a_pad, w_stack, p_stack, *, d_real: int):
    n_pad, d_pad = x_pad.shape
    num_layers = w_stack.shape[0]
    kern = functools.partial(_fused_gnn_kernel, d_real=d_real)
    return pl.pallas_call(
        kern,
        out_shape=jax.ShapeDtypeStruct((n_pad, d_pad), jnp.float32),
        grid_spec=pltpu.PrefetchScalarGridSpec(
            num_scalar_prefetch=0,
            grid=(num_layers,),
            in_specs=[
                pl.BlockSpec((n_pad, d_pad), lambda l: (0, 0)),        # x (once)
                pl.BlockSpec((n_pad, n_pad), lambda l: (0, 0)),        # A (once)
                pl.BlockSpec((1, d_pad, d_pad), lambda l: (l, 0, 0)),  # W_l
                pl.BlockSpec((1, PARAM_ROWS, d_pad), lambda l: (l, 0, 0)),
            ],
            out_specs=pl.BlockSpec((n_pad, d_pad), lambda l: (0, 0)),  # resident
        ),
        compiler_params=pltpu.CompilerParams(
            dimension_semantics=("arbitrary",),   # layers are sequential
        ),
    )(x_pad, a_pad, w_stack, p_stack)


# ------------------------------- JAX glue ------------------------------------
def build_norm_adj(edge_index, num_nodes, n_pad, dtype=jnp.bfloat16):
    """add_self_loops + degree(row) + symmetric norm, packed as dense (Np, Np)."""
    src = edge_index[0]
    dst = edge_index[1]
    loops = jnp.arange(num_nodes, dtype=edge_index.dtype)
    row = jnp.concatenate([src, loops])
    col = jnp.concatenate([dst, loops])
    deg = jnp.zeros((num_nodes,), jnp.float32).at[row].add(1.0)
    deg_inv_sqrt = deg ** -0.5
    norm = deg_inv_sqrt[row] * deg_inv_sqrt[col]
    # y[i] = sum_{e: col[e]==i} norm[e] * x[row[e]]  ->  A[col, row] += norm
    a = jnp.zeros((n_pad, n_pad), jnp.float32).at[col, row].add(norm)
    return a.astype(dtype)


def init_params(key, d_model, num_layers):
    """Stacked, lane-padded per-layer params: W (L,Dp,Dp), slab (L,8,Dp)."""
    d_pad = _round_up(d_model, LANE)
    d_c = d_model // 2
    d_p = d_model - d_c
    w_layers, p_layers = [], []
    for _ in range(num_layers):
        key, kc, kbc, kpw, kbp = jax.random.split(key, 5)
        lim_c = 1.0 / float(d_c) ** 0.5
        lim_p = 1.0 / float(d_p) ** 0.5
        Wc = jax.random.uniform(kc, (d_c, d_c), jnp.float32, -lim_c, lim_c)
        bc = jax.random.uniform(kbc, (d_c,), jnp.float32, -lim_c, lim_c)
        Wp = jax.random.uniform(kpw, (d_p, d_p), jnp.float32, -lim_p, lim_p)
        bp = jax.random.uniform(kbp, (d_p,), jnp.float32, -lim_p, lim_p)
        # nn.Linear computes x @ W^T + b; pack both halves block-diagonally,
        # zero-padded out to (d_pad, d_pad).
        W = jnp.zeros((d_pad, d_pad), jnp.float32)
        W = W.at[:d_c, :d_c].set(Wc.T).at[d_c:d_model, d_c:d_model].set(Wp.T)
        P = jnp.zeros((PARAM_ROWS, d_pad), jnp.float32)
        P = P.at[0, :d_model].set(jnp.concatenate([bc, bp]))   # bias
        P = P.at[1, :d_model].set(1.0)                         # LN gamma
        # row 2 = LN beta (zeros); row 3 = relu gate (filled below)
        w_layers.append(W)
        p_layers.append(P)
    W = jnp.stack(w_layers)
    P = jnp.stack(p_layers)
    gates = jnp.concatenate(
        [jnp.ones((num_layers - 1,), jnp.float32), jnp.zeros((1,), jnp.float32)])
    P = P.at[:, 3, :].set(gates[:, None])                      # ReLU except last
    return W, P


def gnn_forward(w_stack, p_stack, x, edge_index, nodes_of_interest, *, d_model):
    n = x.shape[0]
    n_pad = _round_up(max(n, NODE_PAD), NODE_PAD)
    d_pad = _round_up(d_model, LANE)
    x_pad = jnp.zeros((n_pad, d_pad), jnp.float32).at[:n, :d_model].set(x)
    a_pad = build_norm_adj(edge_index, n, n_pad)
    out = fused_gnn(x_pad, a_pad, w_stack, p_stack, d_real=d_model)
    return out[nodes_of_interest, :d_model]


# --------------------------------- main ---------------------------------------
if __name__ == "__main__":
    N, D_MODEL, NUM_LAYERS, E = 16, 64, 3, 40
    key = jax.random.PRNGKey(0)
    kx, ke, kp = jax.random.split(key, 3)

    x = jax.random.normal(kx, (N, D_MODEL), jnp.float32)
    edge_index = jax.random.randint(ke, (2, E), 0, N, dtype=jnp.int32)
    nodes_of_interest = jnp.array([0, 3, 7, 12], dtype=jnp.int32)
    W, P = init_params(kp, D_MODEL, NUM_LAYERS)

    fwd = jax.jit(functools.partial(gnn_forward, d_model=D_MODEL))
    out = fwd(W, P, x, edge_index, nodes_of_interest)
    jax.block_until_ready(out)
    assert out.shape == (nodes_of_interest.shape[0], D_MODEL)
    print("KERNEL_OK")
</pallas_src>

<mosaic_0001>
module attributes {stable_mosaic.version = 11 : i64} {
  func.func private @main(%arg0: i32) attributes {dimension_semantics = [#tpu.dimension_semantics<core_parallel>], iteration_bounds = array<i64: 2>, tpu.core_type = #tpu.core_type<sc_scalar_subcore>, window_params = []} {
    return
  }
}

module attributes {stable_mosaic.version = 11 : i64} {
  func.func private @main(%arg0: i32) attributes {dimension_semantics = [#tpu.dimension_semantics<core_parallel>], iteration_bounds = array<i64: 2>, tpu.core_type = #tpu.core_type<sc_scalar_subcore>, window_params = []} {
    return
  }
}

module attributes {stable_mosaic.version = 11 : i64} {
  func.func @_fused_gnn_kernel(%arg0: i32, %arg1: memref<16x128xf32, #tpu.memory_space<vmem>>, %arg2: memref<16x16xbf16, #tpu.memory_space<vmem>>, %arg3: memref<1x128x128xf32, #tpu.memory_space<vmem>>, %arg4: memref<1x8x128xf32, #tpu.memory_space<vmem>>, %arg5: memref<16x128xf32, #tpu.memory_space<vmem>>) attributes {dimension_semantics = [#tpu.dimension_semantics<arbitrary>], iteration_bounds = array<i64: 3>, scalar_prefetch = 0 : i64, scratch_operands = 0 : i64, tpu.core_type = #tpu.core_type<tc>, window_params = [{pipeline_mode = #tpu.pipeline_mode<synchronous>, transform_indices = @transform_0, window_bounds = array<i64: 16, 128>}, {pipeline_mode = #tpu.pipeline_mode<synchronous>, transform_indices = @transform_1, window_bounds = array<i64: 16, 16>}, {transform_indices = @transform_2, window_bounds = array<i64: 1, 128, 128>}, {transform_indices = @transform_3, window_bounds = array<i64: 1, 8, 128>}, {pipeline_mode = #tpu.pipeline_mode<synchronous>, transform_indices = @transform_4, window_bounds = array<i64: 16, 128>}]} {
    %c0_i32 = arith.constant 0 : i32
    %0 = arith.cmpi eq, %arg0, %c0_i32 : i32
    %1 = arith.extui %0 : i1 to i32
    %c0_i32_0 = arith.constant 0 : i32
    %2 = arith.cmpi ne, %1, %c0_i32_0 : i32
    scf.if %2 {
      %c0_20 = arith.constant 0 : index
      %c0_21 = arith.constant 0 : index
      %49 = vector.load %arg1[%c0_20, %c0_21] : memref<16x128xf32, #tpu.memory_space<vmem>>, vector<16x128xf32>
      %c0_22 = arith.constant 0 : index
      %c0_23 = arith.constant 0 : index
      %50 = vector.load %arg5[%c0_22, %c0_23] : memref<16x128xf32, #tpu.memory_space<vmem>>, vector<16x128xf32>
      tpu.vector_store %arg5[%c0_22, %c0_23], %49 {strides = array<i32>} : memref<16x128xf32, #tpu.memory_space<vmem>>, vector<16x128xf32>,
    } else {
    }
    %c0 = arith.constant 0 : index
    %c0_1 = arith.constant 0 : index
    %3 = vector.load %arg5[%c0, %c0_1] : memref<16x128xf32, #tpu.memory_space<vmem>>, vector<16x128xf32>
    %c0_2 = arith.constant 0 : index
    %c0_3 = arith.constant 0 : index
    %c0_4 = arith.constant 0 : index
    %4 = vector.load %arg3[%c0_2, %c0_3, %c0_4] : memref<1x128x128xf32, #tpu.memory_space<vmem>>, vector<1x128x128xf32>
    %5 = vector.shape_cast %4 : vector<1x128x128xf32> to vector<128x128xf32>
    %c0_5 = arith.constant 0 : index
    %c0_6 = arith.constant 0 : index
    %c0_7 = arith.constant 0 : index
    %6 = vector.load %arg4[%c0_5, %c0_6, %c0_7] : memref<1x8x128xf32, #tpu.memory_space<vmem>>, vector<1x8x128xf32>
    %7 = vector.shape_cast %6 : vector<1x8x128xf32> to vector<8x128xf32>
    %8 = vector.extract_strided_slice %7 {offsets = [0, 0], sizes = [1, 128], strides = [1, 1]} : vector<8x128xf32> to vector<1x128xf32>
    %9 = vector.extract_strided_slice %7 {offsets = [1, 0], sizes = [1, 128], strides = [1, 1]} : vector<8x128xf32> to vector<1x128xf32>
    %10 = vector.extract_strided_slice %7 {offsets = [2, 0], sizes = [1, 128], strides = [1, 1]} : vector<8x128xf32> to vector<1x128xf32>
    %11 = vector.extract_strided_slice %7 {offsets = [3, 0], sizes = [1, 128], strides = [1, 1]} : vector<8x128xf32> to vector<1x128xf32>
    %cst = arith.constant dense<0.000000e+00> : vector<16x128xf32>
    %12 = tpu.matmul %3, %5, %cst {dimension_numbers = #tpu.dot_dimension_numbers<[1], [0], [0], [1], [0, 0, 1, 1], [], []>} : vector<16x128xf32>, vector<128x128xf32>, vector<16x128xf32> -> vector<16x128xf32>
    %13 = vector.broadcast %8 : vector<1x128xf32> to vector<16x128xf32>
    %14 = arith.addf %12, %13 : vector<16x128xf32>
    %c0_8 = arith.constant 0 : index
    %c0_9 = arith.constant 0 : index
    %15 = vector.load %arg2[%c0_8, %c0_9] : memref<16x16xbf16, #tpu.memory_space<vmem>>, vector<16x16xbf16>
    %16 = arith.truncf %14 : vector<16x128xf32> to vector<16x128xbf16>
    %cst_10 = arith.constant dense<0.000000e+00> : vector<16x128xf32>
    %17 = tpu.matmul %15, %16, %cst_10 {dimension_numbers = #tpu.dot_dimension_numbers<[1], [0], [0], [1], [0, 0, 1, 1], [], []>} : vector<16x16xbf16>, vector<16x128xbf16>, vector<16x128xf32> -> vector<16x128xf32>
    %cst_11 = arith.constant dense<0.000000e+00> : vector<16xf32>
    %18 = vector.multi_reduction <add>, %17, %cst_11 [1] : vector<16x128xf32> to vector<16xf32>
    %19 = vector.shape_cast %18 : vector<16xf32> to vector<16x1xf32>
    %cst_12 = arith.constant 1.562500e-02 : f32
    %20 = vector.broadcast %cst_12 : f32 to vector<16x1xf32>
    %21 = arith.mulf %19, %20 : vector<16x1xf32>
    %22 = arith.mulf %17, %17 : vector<16x128xf32>
    %cst_13 = arith.constant dense<0.000000e+00> : vector<16xf32>
    %23 = vector.multi_reduction <add>, %22, %cst_13 [1] : vector<16x128xf32> to vector<16xf32>
    %24 = vector.shape_cast %23 : vector<16xf32> to vector<16x1xf32>
    %cst_14 = arith.constant 1.562500e-02 : f32
    %25 = vector.broadcast %cst_14 : f32 to vector<16x1xf32>
    %26 = arith.mulf %24, %25 : vector<16x1xf32>
    %27 = arith.mulf %21, %21 : vector<16x1xf32>
    %28 = arith.subf %26, %27 : vector<16x1xf32>
    %cst_15 = arith.constant 0.000000e+00 : f32
    %29 = vector.broadcast %cst_15 : f32 to vector<16x1xf32>
    %30 = arith.maximumf %28, %29 : vector<16x1xf32>
    %31 = vector.broadcast %21 : vector<16x1xf32> to vector<16x128xf32>
    %32 = arith.subf %17, %31 : vector<16x128xf32>
    %cst_16 = arith.constant 9.99999974E-6 : f32
    %33 = vector.broadcast %cst_16 : f32 to vector<16x1xf32>
    %34 = arith.addf %30, %33 : vector<16x1xf32>
    %35 = math.rsqrt %34 : vector<16x1xf32>
    %36 = vector.broadcast %35 : vector<16x1xf32> to vector<16x128xf32>
    %37 = arith.mulf %32, %36 : vector<16x128xf32>
    %38 = vector.broadcast %9 : vector<1x128xf32> to vector<16x128xf32>
    %39 = arith.mulf %37, %38 : vector<16x128xf32>
    %40 = vector.broadcast %10 : vector<1x128xf32> to vector<16x128xf32>
    %41 = arith.addf %39, %40 : vector<16x128xf32>
    %cst_17 = arith.constant 0.000000e+00 : f32
    %42 = vector.broadcast %cst_17 : f32 to vector<16x128xf32>
    %43 = arith.minimumf %41, %42 : vector<16x128xf32>
    %44 = vector.broadcast %11 : vector<1x128xf32> to vector<16x128xf32>
    %45 = arith.mulf %44, %43 : vector<16x128xf32>
    %46 = arith.subf %41, %45 : vector<16x128xf32>
    %47 = arith.addf %3, %46 : vector<16x128xf32>
    %c0_18 = arith.constant 0 : index
    %c0_19 = arith.constant 0 : index
    %48 = vector.load %arg5[%c0_18, %c0_19] : memref<16x128xf32, #tpu.memory_space<vmem>>, vector<16x128xf32>
    tpu.vector_store %arg5[%c0_18, %c0_19], %47 {strides = array<i32>} : memref<16x128xf32, #tpu.memory_space<vmem>>, vector<16x128xf32>,
    return
  }
  func.func @transform_0(%arg0: i32) -> (i32, i32) {
    %c0_i32 = arith.constant 0 : i32
    %c0_i32_0 = arith.constant 0 : i32
    %c0_i32_1 = arith.constant 0 : i32
    return %c0_i32, %c0_i32_0 : i32, i32
  }
  func.func @transform_1(%arg0: i32) -> (i32, i32) {
    %c0_i32 = arith.constant 0 : i32
    %c0_i32_0 = arith.constant 0 : i32
    %c0_i32_1 = arith.constant 0 : i32
    return %c0_i32, %c0_i32_0 : i32, i32
  }
  func.func @transform_2(%arg0: i32) -> (i32, i32, i32) {
    %c0_i32 = arith.constant 0 : i32
    %c0_i32_0 = arith.constant 0 : i32
    %c0_i32_1 = arith.constant 0 : i32
    return %arg0, %c0_i32, %c0_i32_0 : i32, i32, i32
  }
  func.func @transform_3(%arg0: i32) -> (i32, i32, i32) {
    %c0_i32 = arith.constant 0 : i32
    %c0_i32_0 = arith.constant 0 : i32
    %c0_i32_1 = arith.constant 0 : i32
    return %arg0, %c0_i32, %c0_i32_0 : i32, i32, i32
  }
  func.func @transform_4(%arg0: i32) -> (i32, i32) {
    %c0_i32 = arith.constant 0 : i32
    %c0_i32_0 = arith.constant 0 : i32
    %c0_i32_1 = arith.constant 0 : i32
    return %c0_i32, %c0_i32_0 : i32, i32
  }
}

</mosaic_0001>

<llo_original>
// kernel: custom-call.6
$region0: #{custom-call.6}
  %s0 = inlined_call_operand.hbm [shape: f32[4,64], index: 0, kind: output, shape index: {}]

// kernel: mul.1
$region0: #{mul.1}
  #allocation0 [shape = 's32[1]{0}', space=sflag, size = 0x4, scoped, tag = 'scoped memory for mul.1']
  %s0 = inlined_call_operand.vmem [shape: f32[56], index: 0, kind: input, shape index: {}]
  %s1 = inlined_call_operand.vmem [shape: f32[56], index: 1, kind: input, shape index: {}]
  %s2 = inlined_call_operand.vmem [shape: f32[56], index: 2, kind: output, shape index: {}]
  %v3 = vld [vmem:[%s0] sm:$0x1]
  %v4 = vld [vmem:[%s1] sm:$0x1]
  %5 = xla_tuple %v3, %v4
  %6 = xla_tuple %5
  %v7 = vmul.f32 %v3, %v4
  %8 = xla_tuple %v7
  %9 = vst [vmem:[%s2] sm:$0x1] %v7

// kernel: gnn_forward.1
$region0: #{gnn_forward.1}
  #allocation0 [shape = 'u32[]', space=smem, size = 0x4, offset = 0x4, fixed_abs, tag = 'smem constant byte address 0x4 - core index']
  #allocation1 [shape = 'u32[144,128]{1,0:T(1,128)}', space=vmem, size = 0x12000, scoped, tag = 'internal scratch']
  %s0 = inlined_call_operand.vmem [shape: f32[16,128], index: 0, kind: input, shape index: {}]
  %s1 = inlined_call_operand.vmem [shape: bf16[16,16], index: 1, kind: input, shape index: {}]
  %s2 = inlined_call_operand.vmem [shape: f32[3,128,128], index: 2, kind: input, shape index: {}]
  %s3 = inlined_call_operand.vmem [shape: f32[3,8,128], index: 3, kind: input, shape index: {}]
  %s4 = inlined_call_operand.vmem [shape: f32[16,128], index: 4, kind: output, shape index: {}]
  %s5 = sld [smem:[#allocation0]]
  $region53: #{gnn_forward.1} parent=0
    _
  %s7 = ssub.s32 1, %s5
  %s8 = scalar_select 0, %s7, %s5
  loop: start=0, step=1, limit=5
  $region2: #{gnn_forward.1} parent=0 // loop_pre_header
    _
  $region3: #{gnn_forward.1} parent=0 // loop_header
    %s10 = sphi 0, %s14
    %p11 = scmp.ge.s32.totalorder %s10, 5
    %s18 = sphi 0, %s18
    %s20 = sphi 0, %s18
    %s21 = sphi 0, %s20
    %s35 = sphi 0, %s21
    %s39 = sphi 0, %s39
    %s41 = sphi 0, %s39
    %s42 = sphi 0, %s41
    %s56 = sphi 0, %s42
    %s62 = sphi 0, %s64
    %s65 = sphi 0, %s62
    %s66 = sphi 0, %s65
    %s82 = sphi 0, %s66
    %s88 = sphi 0, %s90
    %s91 = sphi 0, %s88
    %s92 = sphi 0, %s91
    %s108 = sphi 0, %s92
    %s112 = sphi 0, %s112
    %s114 = sphi 0, %s112
    %s115 = sphi 0, %s114
    %s129 = sphi 0, %s115
  $region4: #{gnn_forward.1} parent=0 // loop_header_branch
    %13 = sbr.rel (%p11) target = $region8
  $region5: #{gnn_forward.1} parent=0 // loop_body
    %s15 = ssub.s32 %s10, 1
    %s16 = ssub.s32 %s10, 2
    %s17 = sadd.s32 %s10, 1
    %s19 = sadd.s32 %s18, 1
    %p22 = scmp.eq.s32.totalorder %s10, 2
    %p23 = scmp.ne.s32.totalorder %s18, %s20
    %p24 = scmp.eq.s32.totalorder %s10, 0
    %p25 = por %p23, %p24
    %p26 = scmp.ne.s32.totalorder %s18, %s20
    %p27 = scmp.eq.s32.totalorder %s15, 2
    %p28 = por %p26, %p27
    %p29 = scmp.ne.s32.totalorder %s20, %s21
    %p30 = scmp.eq.s32.totalorder %s15, 0
    %p31 = por %p29, %p30
    %p32 = scmp.ne.s32.totalorder %s20, %s21
    %p33 = scmp.eq.s32.totalorder %s16, 2
    %p34 = por %p32, %p33
    %p36 = scmp.ne.s32.totalorder %s21, %s35
    %p37 = scmp.eq.s32.totalorder %s16, 0
    %p38 = por %p36, %p37
    %s40 = sadd.s32 %s39, 1
    %p43 = scmp.eq.s32.totalorder %s10, 2
    %p44 = scmp.ne.s32.totalorder %s39, %s41
    %p45 = scmp.eq.s32.totalorder %s10, 0
    %p46 = por %p44, %p45
    %p47 = scmp.ne.s32.totalorder %s39, %s41
    %p48 = scmp.eq.s32.totalorder %s15, 2
    %p49 = por %p47, %p48
    %p50 = scmp.ne.s32.totalorder %s41, %s42
    %p51 = scmp.eq.s32.totalorder %s15, 0
    %p52 = por %p50, %p51
    %p53 = scmp.ne.s32.totalorder %s41, %s42
    %p54 = scmp.eq.s32.totalorder %s16, 2
    %p55 = por %p53, %p54
    %p57 = scmp.ne.s32.totalorder %s42, %s56
    %p58 = scmp.eq.s32.totalorder %s16, 0
    %p59 = por %p57, %p58
    %s60 = ssub.s32 %s10, %s17
    %p61 = scmp.eq.s32.totalorder %s60, 0
    %s63 = sadd.s32 %s62, 1
    %s64 = scalar_select %p61, %s62, %s63
    %p67 = pneg %p61
    %p68 = scmp.eq.s32.totalorder %s10, 2
    %p69 = por %p67, %p68
    %p70 = scmp.ne.s32.totalorder %s62, %s65
    %p71 = scmp.eq.s32.totalorder %s10, 0
    %p72 = por %p70, %p71
    %p73 = scmp.ne.s32.totalorder %s62, %s65
    %p74 = scmp.eq.s32.totalorder %s15, 2
    %p75 = por %p73, %p74
    %p76 = scmp.ne.s32.totalorder %s65, %s66
    %p77 = scmp.eq.s32.totalorder %s15, 0
    %p78 = por %p76, %p77
    %p79 = scmp.ne.s32.totalorder %s65, %s66
    %p80 = scmp.eq.s32.totalorder %s16, 2
    %p81 = por %p79, %p80
    %p83 = scmp.ne.s32.totalorder %s66, %s82
    %p84 = scmp.eq.s32.totalorder %s16, 0
    %p85 = por %p83, %p84
    %s86 = ssub.s32 %s10, %s17
    %p87 = scmp.eq.s32.totalorder %s86, 0
    %s89 = sadd.s32 %s88, 1
    %s90 = scalar_select %p87, %s88, %s89
    %p93 = pneg %p87
    %p94 = scmp.eq.s32.totalorder %s10, 2
    %p95 = por %p93, %p94
    %p96 = scmp.ne.s32.totalorder %s88, %s91
    %p97 = scmp.eq.s32.totalorder %s10, 0
    %p98 = por %p96, %p97
    %p99 = scmp.ne.s32.totalorder %s88, %s91
    %p100 = scmp.eq.s32.totalorder %s15, 2
    %p101 = por %p99, %p100
    %p102 = scmp.ne.s32.totalorder %s91, %s92
    %p103 = scmp.eq.s32.totalorder %s15, 0
    %p104 = por %p102, %p103
    %p105 = scmp.ne.s32.totalorder %s91, %s92
    %p106 = scmp.eq.s32.totalorder %s16, 2
    %p107 = por %p105, %p106
    %p109 = scmp.ne.s32.totalorder %s92, %s108
    %p110 = scmp.eq.s32.totalorder %s16, 0
    %p111 = por %p109, %p110
    %s113 = sadd.s32 %s112, 1
    %p116 = scmp.eq.s32.totalorder %s10, 2
    %p117 = scmp.ne.s32.totalorder %s112, %s114
    %p118 = scmp.eq.s32.totalorder %s10, 0
    %p119 = por %p117, %p118
    %p120 = scmp.ne.s32.totalorder %s112, %s114
    %p121 = scmp.eq.s32.totalorder %s15, 2
    %p122 = por %p120, %p121
    %p123 = scmp.ne.s32.totalorder %s114, %s115
    %p124 = scmp.eq.s32.totalorder %s15, 0
    %p125 = por %p123, %p124
    %p126 = scmp.ne.s32.totalorder %s114, %s115
    %p127 = scmp.eq.s32.totalorder %s16, 2
    %p128 = por %p126, %p127
    %p130 = scmp.ne.s32.totalorder %s115, %s129
    %p131 = scmp.eq.s32.totalorder %s16, 0
    %p132 = por %p130, %p131
    %p133 = scmp.le.s32.totalorder 1, %s10
    %p134 = scmp.lt.s32.totalorder %s10, 4
    %p135 = pnand %p133, %p134
    %p136 = pneg %p135
    // Predicated region
    $region9: #{gnn_forward.1} parent=5 // pred_check
      _
    $region10: #{gnn_forward.1} parent=5 // pred_check_branch
      %138 = sbr.rel (%p135) target = $region12
    $region11: #{gnn_forward.1} parent=5 // pred_region
      %s139 = ssub.s32 %s10, 1
      // Predicated region
      $region13: #{gnn_forward.1} parent=11 // pred_check
        %p140 = pneg %p31
      $region14: #{gnn_forward.1} parent=11 // pred_check_branch
        %142 = sbr.rel (%p140) target = $region16
      $region15: #{gnn_forward.1} parent=11 // pred_region
        _
      $region16: #{gnn_forward.1} parent=11 // pred_fallthru
        _
      // Predicated region
      $region17: #{gnn_forward.1} parent=11 // pred_check
        %p143 = pneg %p52
      $region18: #{gnn_forward.1} parent=11 // pred_check_branch
        %145 = sbr.rel (%p143) target = $region20
      $region19: #{gnn_forward.1} parent=11 // pred_region
        _
      $region20: #{gnn_forward.1} parent=11 // pred_fallthru
        _
    $region12: #{gnn_forward.1} parent=5 // pred_fallthru
      _
    %p146 = scmp.lt.s32.totalorder %s10, 3
    // Predicated region
    $region21: #{gnn_forward.1} parent=5 // pred_check
      %p147 = pneg %p146
    $region22: #{gnn_forward.1} parent=5 // pred_check_branch
      %149 = sbr.rel (%p147) target = $region24
    $region23: #{gnn_forward.1} parent=5 // pred_region
      // Predicated region
      $region25: #{gnn_forward.1} parent=23 // pred_check
        %p150 = pneg %p72
      $region26: #{gnn_forward.1} parent=23 // pred_check_branch
        %152 = sbr.rel (%p150) target = $region28
      $region27: #{gnn_forward.1} parent=23 // pred_region
        %p153 = scmp.lt.s32.totalorder %s10, 2
        %s154 = scalar_select %p153, %s10, 2
        %s155 = smul.addr %s154, 16
        %s156 = smul.addr %s155, 8
        %s157 = scalar_lea.vmem %s2, %s156
      $region28: #{gnn_forward.1} parent=23 // pred_fallthru
        _
      // Predicated region
      $region29: #{gnn_forward.1} parent=23 // pred_check
        %p158 = pneg %p98
      $region30: #{gnn_forward.1} parent=23 // pred_check_branch
        %160 = sbr.rel (%p158) target = $region32
      $region31: #{gnn_forward.1} parent=23 // pred_region
        %p161 = scmp.lt.s32.totalorder %s10, 2
        %s162 = scalar_select %p161, %s10, 2
        %s163 = smul.addr %s162, 8
        %s164 = scalar_lea.vmem %s3, %s163
      $region32: #{gnn_forward.1} parent=23 // pred_fallthru
        _
    $region24: #{gnn_forward.1} parent=5 // pred_fallthru
      _
    %p165 = scmp.le.s32.totalorder 1, %s10
    %p166 = scmp.lt.s32.totalorder %s10, 4
    %p167 = pnand %p165, %p166
    %p168 = pneg %p167
    // Predicated region
    $region33: #{gnn_forward.1} parent=5 // pred_check
      _
    $region34: #{gnn_forward.1} parent=5 // pred_check_branch
      %170 = sbr.rel (%p167) target = $region36
    $region35: #{gnn_forward.1} parent=5 // pred_region
      %s171 = ssub.s32 %s10, 1
      %p172 = pneg %p31
      %p173 = pneg %p28
      %p174 = pneg %p52
      %p175 = pneg %p49
      %p176 = scmp.lt.s32.totalorder %s15, 2
      %s177 = scalar_select %p176, %s15, 2
      %s178 = smul.addr %s177, 16
      %s179 = smul.addr %s178, 8
      %s180 = scalar_lea.vmem %s2, %s179
      %p181 = pneg %p78
      %p182 = pneg %p75
      %p183 = scmp.lt.s32.totalorder %s15, 2
      %s184 = scalar_select %p183, %s15, 2
      %s185 = smul.addr %s184, 8
      %s186 = scalar_lea.vmem %s3, %s185
      %p187 = pneg %p104
      %p188 = pneg %p101
      %p189 = pneg %p125
      %p190 = pneg %p122
      %p191 = scmp.lt.s32.totalorder %s15, 2
      %s192 = scalar_select %p191, %s15, 2
      %s193 = smul.addr %s192, 16
      %s194 = smul.addr %s193, 8
      %s195 = scalar_lea.vmem %s2, %s194
      %p196 = scmp.lt.s32.totalorder %s15, 2
      %s197 = scalar_select %p196, %s15, 2
      %s198 = smul.addr %s197, 8
      %s199 = scalar_lea.vmem %s3, %s198
      %p201 = scmp.eq.s32.totalorder %s15, 0
      // Predicated region
      $region37: #{gnn_forward.1} parent=35 // pred_check
        %p202 = pneg %p201
      $region38: #{gnn_forward.1} parent=35 // pred_check_branch
        %204 = sbr.rel (%p202) target = $region40
      $region39: #{gnn_forward.1} parent=35 // pred_region
        %v205 = vld [vmem:[%s0] sm:$0xff]
        %v206 = vld [vmem:[%s0 + $0x8] sm:$0xff]
        %207 = vst [vmem:[%s4] sm:$0xff] %v205
        %208 = vst [vmem:[%s4 + $0x8] sm:$0xff] %v206
      $region40: #{gnn_forward.1} parent=35 // pred_fallthru
        _
      %v209 = vld [vmem:[%s4] sm:$0xff]
      %v210 = vld [vmem:[%s4 + $0x8] sm:$0xff]
      %v211 = vld [vmem:[%s195] sm:$0xff]
      %v212 = vld [vmem:[%s195 + $0x8] sm:$0xff]
      %v213 = vld [vmem:[%s195 + $0x10] sm:$0xff]
      %v214 = vld [vmem:[%s195 + $0x18] sm:$0xff]
      %v215 = vld [vmem:[%s195 + $0x20] sm:$0xff]
      %v216 = vld [vmem:[%s195 + $0x28] sm:$0xff]
      %v217 = vld [vmem:[%s195 + $0x30] sm:$0xff]
      %v218 = vld [vmem:[%s195 + $0x38] sm:$0xff]
      %v219 = vld [vmem:[%s195 + $0x40] sm:$0xff]
      %v220 = vld [vmem:[%s195 + $0x48] sm:$0xff]
      %v221 = vld [vmem:[%s195 + $0x50] sm:$0xff]
      %v222 = vld [vmem:[%s195 + $0x58] sm:$0xff]
      %v223 = vld [vmem:[%s195 + $0x60] sm:$0xff]
      %v224 = vld [vmem:[%s195 + $0x68] sm:$0xff]
      %v225 = vld [vmem:[%s195 + $0x70] sm:$0xff]
      %v226 = vld [vmem:[%s195 + $0x78] sm:$0xff]
      %v227 = vld [vmem:[%s199] sm:$0xff]
      %v228 = vlaneseq
      %v229 = vshrl.u32 %v228, 7
      %v230 = vsub.s32 0, %v229
      %v231 = vrot.slane %v227, %v230
      %232 = vmatprep.subr.mxu0 0.0
      %233 = vmatpush1.msra.mxu0 %v226
      %234 = vmatprep.subr.mxu0 0.0
      %235 = vmatpush1.msra.mxu0 %v225
      %236 = vmatprep.subr.mxu0 0.0
      %237 = vmatpush1.msra.mxu0 %v224
      %238 = vmatprep.subr.mxu0 0.0
      %239 = vmatpush1.msra.mxu0 %v223
      %240 = vmatprep.subr.mxu0 0.0
      %241 = vmatpush1.msra.mxu0 %v222
      %242 = vmatprep.subr.mxu0 0.0
      %243 = vmatpush1.msra.mxu0 %v221
      %244 = vmatprep.subr.mxu0 0.0
      %245 = vmatpush1.msra.mxu0 %v220
      %246 = vmatprep.subr.mxu0 0.0
      %247 = vmatpush1.msra.mxu0 %v219
      %248 = vmatprep.subr.mxu0 0.0
      %249 = vmatpush1.msra.mxu0 %v218
      %250 = vmatprep.subr.mxu0 0.0
      %251 = vmatpush1.msra.mxu0 %v217
      %252 = vmatprep.subr.mxu0 0.0
      %253 = vmatpush1.msra.mxu0 %v216
      %254 = vmatprep.subr.mxu0 0.0
      %255 = vmatpush1.msra.mxu0 %v215
      %256 = vmatprep.subr.mxu0 0.0
      %257 = vmatpush1.msra.mxu0 %v214
      %258 = vmatprep.subr.mxu0 0.0
      %259 = vmatpush1.msra.mxu0 %v213
      %260 = vmatprep.subr.mxu0 0.0
      %261 = vmatpush1.msra.mxu0 %v212
      %262 = vmatprep.subr.mxu0 0.0
      %263 = vmatpush1.msra.mxu0 %v211
      %264 = vmatprep.subr.mxu0 0.0
      %265 = vmatpush2.msra.mxu0 0.0
      %266 = vmatprep.subr.mxu0 0.0
      %267 = vmatpush2.msra.mxu0 0.0
      %268 = vmatprep.subr.mxu0 0.0
      %269 = vmatpush2.msra.mxu0 0.0
      %270 = vmatprep.subr.mxu0 0.0
      %271 = vmatpush2.msra.mxu0 0.0
      %272 = vmatprep.subr.mxu0 0.0
      %273 = vmatpush2.msra.mxu0 0.0
      %274 = vmatprep.subr.mxu0 0.0
      %275 = vmatpush2.msra.mxu0 0.0
      %276 = vmatprep.subr.mxu0 0.0
      %277 = vmatpush2.msra.mxu0 0.0
      %278 = vmatprep.subr.mxu0 0.0
      %279 = vmatpush2.msra.mxu0 0.0
      %280 = vmatprep.subr.mxu0 0.0
      %281 = vmatpush2.msra.mxu0 0.0
      %282 = vmatprep.subr.mxu0 0.0
      %283 = vmatpush2.msra.mxu0 0.0
      %284 = vmatprep.subr.mxu0 0.0
      %285 = vmatpush2.msra.mxu0 0.0
      %286 = vmatprep.subr.mxu0 0.0
      %287 = vmatpush2.msra.mxu0 0.0
      %288 = vmatprep.subr.mxu0 0.0
      %289 = vmatpush2.msra.mxu0 0.0
      %290 = vmatprep.subr.mxu0 0.0
      %291 = vmatpush2.msra.mxu0 0.0
      %292 = vmatprep.subr.mxu0 0.0
      %293 = vmatpush2.msra.mxu0 0.0
      %294 = vmatprep.subr.mxu0 0.0
      %295 = vmatpush2.msra.mxu0 0.0
      %296 = vmatprep.mubr.f32.mxu0 0.0
      %297 = vmatmul.mubr.f32.gmra.mxu0 %v209
      %v298 = vpop.f32.mrf.mxu0
      %v299 = vadd.f32 %v231, %v298
      %v300 = vpop.f32.mrf.mxu0
      %301 = vmatprep.mubr.f32.mxu0 0.0
      %302 = vmatmul.mubr.f32.gmra.mxu0 %v210
      %v303 = vpop.f32.mrf.mxu0
      %v304 = vadd.f32 %v231, %v303
      %v305 = vpop.f32.mrf.mxu0
      %306 = vdwg.mxu0
      %v307 = vld [vmem:[%s1] sm:$0xf]
      %v308 = vld [vmem:[%s1 + $0x4] sm:$0xf]
      %v309 = vpack.c.bf16 %v304, %v299
      %v312 = vunpack.c.l.b16 %v307
      %v313 = vunpack.c.l.b16 %v308
      %v314 = vpack.c.b16 %v313, %v312
      %vm315 = vcmask 130048
      %v317 = vsel %vm315, %v314, 0
      %319 = vmatprep.subr.bf16.mxu0 0
      %320 = vmatpush1.bf16.msra.mxu0 0
      %321 = vmatprep.subr.bf16.mxu0 0
      %322 = vmatpush1.bf16.msra.mxu0 0
      %323 = vmatprep.subr.bf16.mxu0 0
      %324 = vmatpush1.bf16.msra.mxu0 0
      %325 = vmatprep.subr.bf16.mxu0 0
      %326 = vmatpush1.bf16.msra.mxu0 0
      %327 = vmatprep.subr.bf16.mxu0 0
      %328 = vmatpush1.bf16.msra.mxu0 0
      %329 = vmatprep.subr.bf16.mxu0 0
      %330 = vmatpush1.bf16.msra.mxu0 0
      %331 = vmatprep.subr.bf16.mxu0 0
      %332 = vmatpush1.bf16.msra.mxu0 0
      %333 = vmatprep.subr.bf16.mxu0 0
      %334 = vmatpush1.bf16.msra.mxu0 %v309
      %335 = vmatprep.subr.bf16.mxu0 0
      %336 = vmatpush2.bf16.msra.mxu0 0
      %337 = vmatprep.subr.bf16.mxu0 0
      %338 = vmatpush2.bf16.msra.mxu0 0
      %339 = vmatprep.subr.bf16.mxu0 0
      %340 = vmatpush2.bf16.msra.mxu0 0
      %341 = vmatprep.subr.bf16.mxu0 0
      %342 = vmatpush2.bf16.msra.mxu0 0
      %343 = vmatprep.subr.bf16.mxu0 0
      %344 = vmatpush2.bf16.msra.mxu0 0
      %345 = vmatprep.subr.bf16.mxu0 0
      %346 = vmatpush2.bf16.msra.mxu0 0
      %347 = vmatprep.subr.bf16.mxu0 0
      %348 = vmatpush2.bf16.msra.mxu0 0
      %349 = vmatprep.subr.bf16.mxu0 0
      %350 = vmatpush2.bf16.msra.mxu0 0
      %351 = vmatprep.mubr.bf16.mxu0 0
      %352 = vmatmul.mubr.bf16.gmra.mxu0 %v317
      %v353 = vpop.f32.mrf.mxu0
      %v354 = vadd.f32 0.0, %v353
      %v355 = vpop.f32.mrf.mxu0
      %v356 = vpop.f32.mrf.mxu0
      %v357 = vadd.f32 0.0, %v356
      %v358 = vpop.f32.mrf.mxu0
      %359 = vdwg.mxu0
      %360 = vadd.xlane.f32.xlu0 %v354
      %v361 = vpop.xlane.xlu0 %360
      %362 = vadd.xlane.f32.xlu0 %v357
      %v363 = vpop.xlane.xlu0 %362
      %v364 = vmul.f32 %v361, 0.015625
      %v365 = vmul.f32 %v363, 0.015625
      %v366 = vmul.f32 %v354, %v354
      %v367 = vmul.f32 %v357, %v357
      %368 = vadd.xlane.f32.xlu0 %v366
      %v369 = vpop.xlane.xlu0 %368
      %370 = vadd.xlane.f32.xlu0 %v367
      %v371 = vpop.xlane.xlu0 %370
      %v372 = vmul.f32 %v369, 0.015625
      %v373 = vmul.f32 %v371, 0.015625
      %v374 = vmul.f32 %v364, %v364
      %v375 = vmul.f32 %v365, %v365
      %v376 = vsub.f32 %v372, %v374
      %v377 = vsub.f32 %v373, %v375
      %v378 = vmax.f32 %v376, 0.0
      %v379 = vmax.f32 %v377, 0.0
      %v380 = vsub.f32 %v354, %v364
      %v381 = vsub.f32 %v357, %v365
      %v382 = vadd.f32 %v378, 1e-05
      %v383 = vadd.f32 %v379, 1e-05
      %v384 = vrsqrt.pop %v382
      %v385 = vrsqrt.pop %v383
      %v386 = vmul.f32 %v380, %v384
      %v387 = vmul.f32 %v381, %v385
      %v388 = vlaneseq
      %v389 = vshrl.u32 %v388, 7
      %v390 = vsub.s32 1, %v389
      %v391 = vrot.slane %v227, %v390
      %v392 = vmul.f32 %v386, %v391
      %v393 = vmul.f32 %v387, %v391
      %v394 = vlaneseq
      %v395 = vshrl.u32 %v394, 7
      %v396 = vsub.s32 2, %v395
      %v397 = vrot.slane %v227, %v396
      %v398 = vadd.f32 %v392, %v397
      %v399 = vadd.f32 %v393, %v397
      %v400 = vmin.f32 %v398, 0.0
      %v401 = vmin.f32 %v399, 0.0
      %v402 = vlaneseq
      %v403 = vshrl.u32 %v402, 7
      %v404 = vsub.s32 3, %v403
      %v405 = vrot.slane %v227, %v404
      %v406 = vmul.f32 %v405, %v400
      %v407 = vmul.f32 %v405, %v401
      %v408 = vsub.f32 %v398, %v406
      %v409 = vsub.f32 %v399, %v407
      %v410 = vadd.f32 %v209, %v408
      %v411 = vadd.f32 %v210, %v409
      %412 = vst [vmem:[%s4] sm:$0xff] %v410
      %413 = vst [vmem:[%s4 + $0x8] sm:$0xff] %v411
      // Predicated region
      $region41: #{gnn_forward.1} parent=35 // pred_check
        %p414 = pneg %p122
      $region42: #{gnn_forward.1} parent=35 // pred_check_branch
        %416 = sbr.rel (%p414) target = $region44
      $region43: #{gnn_forward.1} parent=35 // pred_region
        _
      $region44: #{gnn_forward.1} parent=35 // pred_fallthru
        _
      // Predicated region
      $region45: #{gnn_forward.1} parent=35 // pred_check
        %p417 = pneg %p122
      $region46: #{gnn_forward.1} parent=35 // pred_check_branch
        %419 = sbr.rel (%p417) target = $region48
      $region47: #{gnn_forward.1} parent=35 // pred_region
        _
      $region48: #{gnn_forward.1} parent=35 // pred_fallthru
        _
    $region36: #{gnn_forward.1} parent=5 // pred_fallthru
      _
    %p420 = scmp.le.s32.totalorder 2, %s10
    // Predicated region
    $region49: #{gnn_forward.1} parent=5 // pred_check
      %p421 = pneg %p420
    $region50: #{gnn_forward.1} parent=5 // pred_check_branch
      %423 = sbr.rel (%p421) target = $region52
    $region51: #{gnn_forward.1} parent=5 // pred_region
      %s424 = ssub.s32 %s10, 2
    $region52: #{gnn_forward.1} parent=5 // pred_fallthru
      _
  $region6: #{gnn_forward.1} parent=0 // loop_footer
    %s14 = sadd.s32 1, %s10
  $region7: #{gnn_forward.1} parent=0 // loop_footer_branch
    %9 = sbr.rel target = $region3
  $region8: #{gnn_forward.1} parent=0 // loop_exit
    _

</llo_original>
